<compile_context>
chip_gen: v6e
topology: v6e:2x2x1
jax: 0.10.0
libtpu: 0.0.40
codegen_flags: <defaults>
</compile_context>

<pallas_src>
import jax
import jax.numpy as jnp
from jax.experimental import pallas as pl
from jax.experimental.pallas import tpu as pltpu

LANE = 128      # lane width of a vreg / MXU column dim
SUBLANE = 8     # f32 sublane count


def _cdiv(a, b):
    return -(-a // b)


def _round_up(n, m):
    return ((n + m - 1) // m) * m


def _pad_axis(a, target, axis):
    pad = target - a.shape[axis]
    if pad == 0:
        return a
    cfg = [(0, 0)] * a.ndim
    cfg[axis] = (0, pad)
    return jnp.pad(a, cfg)


def qnetwork_kernel(x_ref, w1_ref, b1_ref, w2_ref, b2_ref, w3_ref, b3_ref,
                    o_ref):
    # fc1 + relu  (MXU accumulates in f32; bias/ReLU stay f32 -> v5e VPU ok)
    h1 = jnp.dot(x_ref[...], w1_ref[...], preferred_element_type=jnp.float32)
    h1 = jnp.maximum(h1 + b1_ref[...], 0.0)
    # fc2 + relu
    h2 = jnp.dot(h1.astype(w2_ref.dtype), w2_ref[...],
                 preferred_element_type=jnp.float32)
    h2 = jnp.maximum(h2 + b2_ref[...], 0.0)
    # fc3 (no activation)
    out = jnp.dot(h2.astype(w3_ref.dtype), w3_ref[...],
                  preferred_element_type=jnp.float32)
    o_ref[...] = (out + b3_ref[...]).astype(o_ref.dtype)


def _choose_batch_tiling(B, tile_b, num_cores, row_align):
    """Pick (rows_per_tile, n_tiles).  n_tiles is a multiple of num_cores
    (even TensorCore split on v7x) with minimal batch padding; tiny batches
    collapse to a single tile (caller then drops the grid)."""
    tile_b = max(row_align, _round_up(tile_b, row_align))
    n0 = _cdiv(B, tile_b)
    if n0 <= 1:
        if num_cores > 1 and B >= num_cores * LANE:
            # Fits in one tile but is tall enough to give each core a decent
            # (>=128-row) LHS: split it so both v7x TensorCores work.
            n = num_cores
        else:
            return _round_up(max(B, 1), row_align), 1
    else:
        n = _round_up(n0, num_cores)
    tb = _round_up(_cdiv(B, n), row_align)
    return tb, n


def prepare_params(params, *, matmul_dtype=jnp.bfloat16):
    """Pad + cast weights/biases ONCE.  Cache the result; do not redo per call."""
    w1, b1, w2, b2, w3, b3 = (params["w1"], params["b1"], params["w2"],
                              params["b2"], params["w3"], params["b3"])
    itemsize = jnp.dtype(matmul_dtype).itemsize
    row_align = SUBLANE * (4 // itemsize)        # 8 for f32, 16 for bf16
    D, H = w1.shape
    O = w3.shape[1]
    Dp = _round_up(D, row_align)   # fc1 K: only packing-aligned, no 128 inflation
    Hp = _round_up(H, LANE)        # lane-dense hidden
    Op = _round_up(O, LANE)        # lane-dense output -> unmasked vst
    prepped = dict(
        w1=_pad_axis(_pad_axis(w1, Dp, 0), Hp, 1).astype(matmul_dtype),
        w2=_pad_axis(_pad_axis(w2, Hp, 0), Hp, 1).astype(matmul_dtype),
        w3=_pad_axis(_pad_axis(w3, Hp, 0), Op, 1).astype(matmul_dtype),
        b1=_pad_axis(b1, Hp, 1).astype(jnp.float32),
        b2=_pad_axis(b2, Hp, 1).astype(jnp.float32),
        b3=_pad_axis(b3, Op, 1).astype(jnp.float32),
    )
    dims = dict(in_features=D, out_features=O, row_align=row_align)
    return prepped, dims


def make_qnetwork(params, *, matmul_dtype=jnp.bfloat16, tile_b=512,
                  num_cores=2):
    """Returns a jitted forward(x) closing over padded/cast params.

    matmul_dtype: MXU operand dtype (bf16 default on every generation;
    accumulation, bias add and ReLU always run in f32).  num_cores=2 targets
    v7x's two TensorCores; the extra tile on v5e/v6e is negligible.
    """
    prepped, dims = prepare_params(params, matmul_dtype=matmul_dtype)
    D, O, row_align = dims["in_features"], dims["out_features"], dims["row_align"]
    Dp, Hp = prepped["w1"].shape
    Op = prepped["w3"].shape[1]
    itemsize = jnp.dtype(matmul_dtype).itemsize
    w_bytes = sum(prepped[k].size for k in ("w1", "w2", "w3")) * itemsize
    b_bytes = sum(prepped[k].size for k in ("b1", "b2", "b3")) * 4

    @jax.jit
    def forward(x):
        B = x.shape[0]
        assert x.shape[1] == D, "feature dim mismatch"
        tb, n_tiles = _choose_batch_tiling(B, tile_b, num_cores, row_align)
        Bp = tb * n_tiles

        # Only the activations are padded per call (zeros in padded rows/cols).
        xp = _pad_axis(_pad_axis(x, Bp, 0), Dp, 1).astype(matmul_dtype)

        cost = pl.CostEstimate(
            flops=2 * Bp * (Dp * Hp + Hp * Hp + Hp * Op),
            transcendentals=0,
            bytes_accessed=xp.size * itemsize + w_bytes + b_bytes + Bp * Op * 4,
        )
        out_shape = jax.ShapeDtypeStruct((Bp, Op), jnp.float32)
        args = (xp, prepped["w1"], prepped["b1"], prepped["w2"], prepped["b2"],
                prepped["w3"], prepped["b3"])

        if n_tiles == 1:
            # Launch-latency path: no grid -> no pipeline prologue/epilogue;
            # whole (padded) problem lives in VMEM (well under any limit).
            out = pl.pallas_call(
                qnetwork_kernel,
                out_shape=out_shape,
                compiler_params=pltpu.CompilerParams(
                    vmem_limit_bytes=32 * 1024 * 1024),
                cost_estimate=cost,
            )(*args)
        else:
            out = pl.pallas_call(
                qnetwork_kernel,
                out_shape=out_shape,
                grid=(n_tiles,),
                in_specs=[
                    # activation tile streams over the batch grid...
                    pl.BlockSpec((tb, Dp), lambda i: (i, 0)),
                    # ...weights & biases DMA'd once, stay VMEM resident.
                    pl.BlockSpec((Dp, Hp), lambda i: (0, 0)),
                    pl.BlockSpec((1, Hp), lambda i: (0, 0)),
                    pl.BlockSpec((Hp, Hp), lambda i: (0, 0)),
                    pl.BlockSpec((1, Hp), lambda i: (0, 0)),
                    pl.BlockSpec((Hp, Op), lambda i: (0, 0)),
                    pl.BlockSpec((1, Op), lambda i: (0, 0)),
                ],
                out_specs=pl.BlockSpec((tb, Op), lambda i: (i, 0)),
                compiler_params=pltpu.CompilerParams(
                    dimension_semantics=("parallel",),   # v7x: 2 TC split
                    vmem_limit_bytes=32 * 1024 * 1024),
                cost_estimate=cost,
            )(*args)

        # Padded batch rows hold relu(b1)-driven garbage; padded feature cols
        # are exact zeros.  Both are stripped here -- never reduce over the
        # padded output before this slice.
        return out[:B, :O]

    return forward


def init_params(key, total_nodes, hidden_size, nodes_per_layer):
    """Deterministic init mimicking nn.Linear's uniform(-1/sqrt(fan_in), ...)."""
    ks = jax.random.split(key, 6)

    def linear(kw, kb, fan_in, fan_out):
        bound = 1.0 / jnp.sqrt(fan_in)
        # stored transposed: (in_features, out_features)
        w = jax.random.uniform(kw, (fan_in, fan_out), jnp.float32, -bound, bound)
        b = jax.random.uniform(kb, (1, fan_out), jnp.float32, -bound, bound)
        return w, b

    w1, b1 = linear(ks[0], ks[1], total_nodes, hidden_size)
    w2, b2 = linear(ks[2], ks[3], hidden_size, hidden_size)
    w3, b3 = linear(ks[4], ks[5], hidden_size, nodes_per_layer)
    return {"w1": w1, "b1": b1, "w2": w2, "b2": b2, "w3": w3, "b3": b3}


def reference_forward(x, p):
    h1 = jnp.maximum(x @ p["w1"] + p["b1"], 0.0)
    h2 = jnp.maximum(h1 @ p["w2"] + p["b2"], 0.0)
    return h2 @ p["w3"] + p["b3"]


if __name__ == "__main__":
    total_nodes = 32
    hidden_size = 64
    nodes_per_layer = 16

    key = jax.random.PRNGKey(0)
    k_p, k_x1, k_x2, k_x3 = jax.random.split(key, 4)
    params = init_params(k_p, total_nodes, hidden_size, nodes_per_layer)

    fwd_bf16 = make_qnetwork(params)                          # default fast path
    fwd_f32 = make_qnetwork(params, matmul_dtype=jnp.float32)  # exact path

    # 1) Tiny batch -> single tile, no grid (launch-latency path).
    x = jax.random.normal(k_x1, (8, total_nodes), jnp.float32)
    ref = reference_forward(x, params)
    out = jax.block_until_ready(fwd_f32(x))
    assert out.shape == (8, nodes_per_layer)
    assert jnp.allclose(out, ref, atol=1e-5, rtol=1e-5)
    out_bf = jax.block_until_ready(fwd_bf16(x))
    assert jnp.allclose(out_bf, ref, atol=5e-2, rtol=5e-2)  # bf16 operand trade-off

    # 2) Moderate batch (fits one 512-row tile) -> split into 2 tiles so both
    #    v7x TensorCores get work, with minimal padding (260 -> 2 x 136/144).
    x260 = jax.random.normal(k_x2, (260, total_nodes), jnp.float32)
    ref260 = reference_forward(x260, params)
    out260 = jax.block_until_ready(fwd_f32(x260))
    assert out260.shape == (260, nodes_per_layer)
    assert jnp.allclose(out260, ref260, atol=1e-5, rtol=1e-5)
    out260_bf = jax.block_until_ready(fwd_bf16(x260))
    assert jnp.allclose(out260_bf, ref260, atol=5e-2, rtol=5e-2)

    # 3) Large batch -> multi-tile grid, tile count rounded to a multiple of 2
    #    (600 rows -> 2 tiles of 304, weights stay resident across steps).
    x600 = jax.random.normal(k_x3, (600, total_nodes), jnp.float32)
    ref600 = reference_forward(x600, params)
    out600 = jax.block_until_ready(fwd_f32(x600))
    assert out600.shape == (600, nodes_per_layer)
    assert jnp.allclose(out600, ref600, atol=1e-5, rtol=1e-5)

    print("KERNEL_OK")
</pallas_src>

<mosaic_0001>
module attributes {stable_mosaic.version = 11 : i64} {
  func.func @qnetwork_kernel(%arg0: memref<8x32xf32, #tpu.memory_space<vmem>>, %arg1: memref<32x128xf32, #tpu.memory_space<vmem>>, %arg2: memref<1x128xf32, #tpu.memory_space<vmem>>, %arg3: memref<128x128xf32, #tpu.memory_space<vmem>>, %arg4: memref<1x128xf32, #tpu.memory_space<vmem>>, %arg5: memref<128x128xf32, #tpu.memory_space<vmem>>, %arg6: memref<1x128xf32, #tpu.memory_space<vmem>>, %arg7: memref<8x128xf32, #tpu.memory_space<vmem>>) attributes {dimension_semantics = [], scalar_prefetch = 0 : i64, scratch_operands = 0 : i64, tpu.core_type = #tpu.core_type<tc>} {
    %c0 = arith.constant 0 : index
    %c0_0 = arith.constant 0 : index
    %0 = vector.load %arg0[%c0, %c0_0] : memref<8x32xf32, #tpu.memory_space<vmem>>, vector<8x32xf32>
    %c0_1 = arith.constant 0 : index
    %c0_2 = arith.constant 0 : index
    %1 = vector.load %arg1[%c0_1, %c0_2] : memref<32x128xf32, #tpu.memory_space<vmem>>, vector<32x128xf32>
    %cst = arith.constant dense<0.000000e+00> : vector<8x128xf32>
    %2 = tpu.matmul %0, %1, %cst {dimension_numbers = #tpu.dot_dimension_numbers<[1], [0], [0], [1], [0, 0, 1, 1], [], []>} : vector<8x32xf32>, vector<32x128xf32>, vector<8x128xf32> -> vector<8x128xf32>
    %c0_3 = arith.constant 0 : index
    %c0_4 = arith.constant 0 : index
    %3 = vector.load %arg2[%c0_3, %c0_4] : memref<1x128xf32, #tpu.memory_space<vmem>>, vector<1x128xf32>
    %4 = vector.broadcast %3 : vector<1x128xf32> to vector<8x128xf32>
    %5 = arith.addf %2, %4 : vector<8x128xf32>
    %cst_5 = arith.constant 0.000000e+00 : f32
    %6 = vector.broadcast %cst_5 : f32 to vector<8x128xf32>
    %7 = arith.maximumf %5, %6 : vector<8x128xf32>
    %c0_6 = arith.constant 0 : index
    %c0_7 = arith.constant 0 : index
    %8 = vector.load %arg3[%c0_6, %c0_7] : memref<128x128xf32, #tpu.memory_space<vmem>>, vector<128x128xf32>
    %cst_8 = arith.constant dense<0.000000e+00> : vector<8x128xf32>
    %9 = tpu.matmul %7, %8, %cst_8 {dimension_numbers = #tpu.dot_dimension_numbers<[1], [0], [0], [1], [0, 0, 1, 1], [], []>} : vector<8x128xf32>, vector<128x128xf32>, vector<8x128xf32> -> vector<8x128xf32>
    %c0_9 = arith.constant 0 : index
    %c0_10 = arith.constant 0 : index
    %10 = vector.load %arg4[%c0_9, %c0_10] : memref<1x128xf32, #tpu.memory_space<vmem>>, vector<1x128xf32>
    %11 = vector.broadcast %10 : vector<1x128xf32> to vector<8x128xf32>
    %12 = arith.addf %9, %11 : vector<8x128xf32>
    %cst_11 = arith.constant 0.000000e+00 : f32
    %13 = vector.broadcast %cst_11 : f32 to vector<8x128xf32>
    %14 = arith.maximumf %12, %13 : vector<8x128xf32>
    %c0_12 = arith.constant 0 : index
    %c0_13 = arith.constant 0 : index
    %15 = vector.load %arg5[%c0_12, %c0_13] : memref<128x128xf32, #tpu.memory_space<vmem>>, vector<128x128xf32>
    %cst_14 = arith.constant dense<0.000000e+00> : vector<8x128xf32>
    %16 = tpu.matmul %14, %15, %cst_14 {dimension_numbers = #tpu.dot_dimension_numbers<[1], [0], [0], [1], [0, 0, 1, 1], [], []>} : vector<8x128xf32>, vector<128x128xf32>, vector<8x128xf32> -> vector<8x128xf32>
    %c0_15 = arith.constant 0 : index
    %c0_16 = arith.constant 0 : index
    %17 = vector.load %arg6[%c0_15, %c0_16] : memref<1x128xf32, #tpu.memory_space<vmem>>, vector<1x128xf32>
    %18 = vector.broadcast %17 : vector<1x128xf32> to vector<8x128xf32>
    %19 = arith.addf %16, %18 : vector<8x128xf32>
    %c0_17 = arith.constant 0 : index
    %c0_18 = arith.constant 0 : index
    %20 = vector.load %arg7[%c0_17, %c0_18] : memref<8x128xf32, #tpu.memory_space<vmem>>, vector<8x128xf32>
    tpu.vector_store %arg7[%c0_17, %c0_18], %19 {strides = array<i32>} : memref<8x128xf32, #tpu.memory_space<vmem>>, vector<8x128xf32>,
    return
  }
}

</mosaic_0001>

<llo_original>
// kernel: forward.1
$region0: #{forward.1}
  #allocation0 [shape = 'u32[]', space=smem, size = 0x4, offset = 0x4, fixed_abs, tag = 'smem constant byte address 0x4 - core index']
  #allocation1 [shape = 'u32[144,128]{1,0:T(1,128)}', space=vmem, size = 0x12000, scoped, tag = 'internal scratch']
  %s0 = inlined_call_operand.hbm [shape: f32[8,32], index: 0, kind: input, shape index: {}]
  %s1 = inlined_call_operand.hbm [shape: f32[32,128], index: 1, kind: input, shape index: {}]
  %s2 = inlined_call_operand.vmem [shape: f32[1,128], index: 2, kind: input, shape index: {}]
  %s3 = inlined_call_operand.hbm [shape: f32[128,128], index: 3, kind: input, shape index: {}]
  %s4 = inlined_call_operand.vmem [shape: f32[1,128], index: 4, kind: input, shape index: {}]
  %s5 = inlined_call_operand.hbm [shape: f32[128,128], index: 5, kind: input, shape index: {}]
  %s6 = inlined_call_operand.vmem [shape: f32[1,128], index: 6, kind: input, shape index: {}]
  %s7 = inlined_call_operand.hbm [shape: f32[8,128], index: 7, kind: output, shape index: {}]
  %s8 = sld [smem:[#allocation0]]
  $region54: #{forward.1} parent=0
    _
  %s10 = ssub.s32 1, %s8
  %s11 = scalar_select 0, %s10, %s8
  $region1: #{forward.1} parent=0
    #allocation2 [shape = 'u8[4096]{0}', space=vmem, size = 0x1000, scoped, tag = 'input window, operand 0, single buffered']
    #allocation3 [shape = 's32[1]{0}', space=sflag, size = 0x4, scoped, tag = 'scoped memory for forward.1']
    #allocation4 [shape = 's32[1]{0}', space=sflag, size = 0x4, scoped, tag = 'scoped memory for forward.1']
    #allocation5 [shape = 'u8[16384]{0}', space=vmem, size = 0x4000, scoped, tag = 'input window, operand 1, single buffered']
    #allocation6 [shape = 's32[1]{0}', space=sflag, size = 0x4, scoped, tag = 'scoped memory for forward.1']
    #allocation7 [shape = 'u8[65536]{0}', space=vmem, size = 0x10000, scoped, tag = 'input window, operand 3, single buffered']
    #allocation8 [shape = 'u8[65536]{0}', space=vmem, size = 0x10000, scoped, tag = 'input window, operand 5, single buffered']
    #allocation9 [shape = 's32[1]{0}', space=sflag, size = 0x4, scoped, tag = 'scoped memory for forward.1']
    #allocation10 [shape = 'u8[4096]{0}', space=vmem, size = 0x1000, scoped, tag = 'output window, operand 0, single buffered']
    %12 = vsyncpa [#allocation3], 0
    %13 = vsyncpa [#allocation6], 0
    %14 = vsyncpa [#allocation9], 0
    %15 = vsyncpa [#allocation4], 0
    // Predicated region
    $region2: #{forward.1} parent=1 // pred_check
      _
    $region3: #{forward.1} parent=1 // pred_check_branch
      %17 = sbr.rel (0) target = $region5
    $region4: #{forward.1} parent=1 // pred_region
      %s19 = ssub.s32 128, 128
      %20 = vsyncadd [#allocation3], %s19
      %s22 = sshll.u32 [#allocation2], 4
      %s23 = int_to_ptr.vmem [resolvable:$true] %s22
      %25 = dma.hbm_to_vmem [thread:$0]  %s0, 128, %s23, [#allocation3]
    $region5: #{forward.1} parent=1 // pred_fallthru
      _
    // Predicated region
    $region6: #{forward.1} parent=1 // pred_check
      _
    $region7: #{forward.1} parent=1 // pred_check_branch
      %27 = sbr.rel (0) target = $region9
    $region8: #{forward.1} parent=1 // pred_region
      %s29 = ssub.s32 512, 512
      %30 = vsyncadd [#allocation6], %s29
      %s31 = sshll.u32 [#allocation5], 4
      %s32 = int_to_ptr.vmem [resolvable:$true] %s31
      %37 = dma.hbm_to_vmem [thread:$0]  %s1, 512, %s32, [#allocation6], 128, 128, 8
    $region9: #{forward.1} parent=1 // pred_fallthru
      _
    // Predicated region
    $region10: #{forward.1} parent=1 // pred_check
      _
    $region11: #{forward.1} parent=1 // pred_check_branch
      %39 = sbr.rel (0) target = $region13
    $region12: #{forward.1} parent=1 // pred_region
      _
    $region13: #{forward.1} parent=1 // pred_fallthru
      _
    // Predicated region
    $region14: #{forward.1} parent=1 // pred_check
      _
    $region15: #{forward.1} parent=1 // pred_check_branch
      %41 = sbr.rel (0) target = $region17
    $region16: #{forward.1} parent=1 // pred_region
      %s43 = ssub.s32 2048, 2048
      %44 = vsyncadd [#allocation6], %s43
      %s45 = sshll.u32 [#allocation7], 4
      %s46 = int_to_ptr.vmem [resolvable:$true] %s45
      %51 = dma.hbm_to_vmem [thread:$0]  %s3, 2048, %s46, [#allocation6], 128, 128, 8
    $region17: #{forward.1} parent=1 // pred_fallthru
      _
    // Predicated region
    $region18: #{forward.1} parent=1 // pred_check
      _
    $region19: #{forward.1} parent=1 // pred_check_branch
      %53 = sbr.rel (0) target = $region21
    $region20: #{forward.1} parent=1 // pred_region
      _
    $region21: #{forward.1} parent=1 // pred_fallthru
      _
    // Predicated region
    $region22: #{forward.1} parent=1 // pred_check
      _
    $region23: #{forward.1} parent=1 // pred_check_branch
      %55 = sbr.rel (0) target = $region25
    $region24: #{forward.1} parent=1 // pred_region
      %s57 = ssub.s32 2048, 2048
      %58 = vsyncadd [#allocation9], %s57
      %s59 = sshll.u32 [#allocation8], 4
      %s60 = int_to_ptr.vmem [resolvable:$true] %s59
      %65 = dma.hbm_to_vmem [thread:$0]  %s5, 2048, %s60, [#allocation9], 128, 128, 8
    $region25: #{forward.1} parent=1 // pred_fallthru
      _
    // Predicated region
    $region26: #{forward.1} parent=1 // pred_check
      _
    $region27: #{forward.1} parent=1 // pred_check_branch
      %67 = sbr.rel (0) target = $region29
    $region28: #{forward.1} parent=1 // pred_region
      _
    $region29: #{forward.1} parent=1 // pred_fallthru
      _
    // Predicated region
    $region30: #{forward.1} parent=1 // pred_check
      _
    $region31: #{forward.1} parent=1 // pred_check_branch
      %69 = sbr.rel (0) target = $region33
    $region32: #{forward.1} parent=1 // pred_region
      %70 = dma.done [#allocation3], 128
    $region33: #{forward.1} parent=1 // pred_fallthru
      _
    // Predicated region
    $region34: #{forward.1} parent=1 // pred_check
      _
    $region35: #{forward.1} parent=1 // pred_check_branch
      %72 = sbr.rel (0) target = $region37
    $region36: #{forward.1} parent=1 // pred_region
      %73 = dma.done [#allocation6], 512
    $region37: #{forward.1} parent=1 // pred_fallthru
      _
    // Predicated region
    $region38: #{forward.1} parent=1 // pred_check
      _
    $region39: #{forward.1} parent=1 // pred_check_branch
      %75 = sbr.rel (0) target = $region41
    $region40: #{forward.1} parent=1 // pred_region
      %76 = dma.done [#allocation6], 2048
    $region41: #{forward.1} parent=1 // pred_fallthru
      _
    // Predicated region
    $region42: #{forward.1} parent=1 // pred_check
      _
    $region43: #{forward.1} parent=1 // pred_check_branch
      %78 = sbr.rel (0) target = $region45
    $region44: #{forward.1} parent=1 // pred_region
      %79 = dma.done [#allocation9], 2048
    $region45: #{forward.1} parent=1 // pred_fallthru
      _
    %v80 = vld [vmem:[#allocation2] sm:$0xff]
    %v81 = vld [vmem:[#allocation5] sm:$0xff]
    %v82 = vld [vmem:[#allocation5 + $0x8] sm:$0xff]
    %v83 = vld [vmem:[#allocation5 + $0x10] sm:$0xff]
    %v84 = vld [vmem:[#allocation5 + $0x18] sm:$0xff]
    %v85 = vld [vmem:[%s2] sm:$0x1]
    %v87 = vlaneseq
    %v88 = vshrl.u32 %v87, 7
    %v89 = vsub.s32 0, %v88
    %v90 = vrot.slane %v85, %v89
    %vm92 = vcmask 261120
    %v94 = vsel %vm92, %v80, 0
    %96 = vmatprep.subr.mxu0 0.0
    %97 = vmatpush1.msra.mxu0 0.0
    %98 = vmatprep.subr.mxu0 0.0
    %99 = vmatpush1.msra.mxu0 0.0
    %100 = vmatprep.subr.mxu0 0.0
    %101 = vmatpush1.msra.mxu0 0.0
    %102 = vmatprep.subr.mxu0 0.0
    %103 = vmatpush1.msra.mxu0 0.0
    %104 = vmatprep.subr.mxu0 0.0
    %105 = vmatpush1.msra.mxu0 0.0
    %106 = vmatprep.subr.mxu0 0.0
    %107 = vmatpush1.msra.mxu0 0.0
    %108 = vmatprep.subr.mxu0 0.0
    %109 = vmatpush1.msra.mxu0 0.0
    %110 = vmatprep.subr.mxu0 0.0
    %111 = vmatpush1.msra.mxu0 0.0
    %112 = vmatprep.subr.mxu0 0.0
    %113 = vmatpush1.msra.mxu0 0.0
    %114 = vmatprep.subr.mxu0 0.0
    %115 = vmatpush1.msra.mxu0 0.0
    %116 = vmatprep.subr.mxu0 0.0
    %117 = vmatpush1.msra.mxu0 0.0
    %118 = vmatprep.subr.mxu0 0.0
    %119 = vmatpush1.msra.mxu0 0.0
    %120 = vmatprep.subr.mxu0 0.0
    %121 = vmatpush1.msra.mxu0 %v84
    %122 = vmatprep.subr.mxu0 0.0
    %123 = vmatpush1.msra.mxu0 %v83
    %124 = vmatprep.subr.mxu0 0.0
    %125 = vmatpush1.msra.mxu0 %v82
    %126 = vmatprep.subr.mxu0 0.0
    %127 = vmatpush1.msra.mxu0 %v81
    %128 = vmatprep.subr.mxu0 0.0
    %129 = vmatpush2.msra.mxu0 0.0
    %130 = vmatprep.subr.mxu0 0.0
    %131 = vmatpush2.msra.mxu0 0.0
    %132 = vmatprep.subr.mxu0 0.0
    %133 = vmatpush2.msra.mxu0 0.0
    %134 = vmatprep.subr.mxu0 0.0
    %135 = vmatpush2.msra.mxu0 0.0
    %136 = vmatprep.subr.mxu0 0.0
    %137 = vmatpush2.msra.mxu0 0.0
    %138 = vmatprep.subr.mxu0 0.0
    %139 = vmatpush2.msra.mxu0 0.0
    %140 = vmatprep.subr.mxu0 0.0
    %141 = vmatpush2.msra.mxu0 0.0
    %142 = vmatprep.subr.mxu0 0.0
    %143 = vmatpush2.msra.mxu0 0.0
    %144 = vmatprep.subr.mxu0 0.0
    %145 = vmatpush2.msra.mxu0 0.0
    %146 = vmatprep.subr.mxu0 0.0
    %147 = vmatpush2.msra.mxu0 0.0
    %148 = vmatprep.subr.mxu0 0.0
    %149 = vmatpush2.msra.mxu0 0.0
    %150 = vmatprep.subr.mxu0 0.0
    %151 = vmatpush2.msra.mxu0 0.0
    %152 = vmatprep.subr.mxu0 0.0
    %153 = vmatpush2.msra.mxu0 0.0
    %154 = vmatprep.subr.mxu0 0.0
    %155 = vmatpush2.msra.mxu0 0.0
    %156 = vmatprep.subr.mxu0 0.0
    %157 = vmatpush2.msra.mxu0 0.0
    %158 = vmatprep.subr.mxu0 0.0
    %159 = vmatpush2.msra.mxu0 0.0
    %160 = vmatprep.mubr.f32.mxu0 0.0
    %161 = vmatmul.mubr.f32.gmra.mxu0 %v94
    %v162 = vpop.f32.mrf.mxu0
    %v163 = vadd.f32 %v90, %v162
    %v164 = vpop.f32.mrf.mxu0
    %165 = vdwg.mxu0
    %v166 = vmax.f32 %v163, 0.0
    %v167 = vld [vmem:[#allocation7] sm:$0xff]
    %v168 = vld [vmem:[#allocation7 + $0x8] sm:$0xff]
    %v169 = vld [vmem:[#allocation7 + $0x10] sm:$0xff]
    %v170 = vld [vmem:[#allocation7 + $0x18] sm:$0xff]
    %v171 = vld [vmem:[#allocation7 + $0x20] sm:$0xff]
    %v172 = vld [vmem:[#allocation7 + $0x28] sm:$0xff]
    %v173 = vld [vmem:[#allocation7 + $0x30] sm:$0xff]
    %v174 = vld [vmem:[#allocation7 + $0x38] sm:$0xff]
    %v175 = vld [vmem:[#allocation7 + $0x40] sm:$0xff]
    %v176 = vld [vmem:[#allocation7 + $0x48] sm:$0xff]
    %v177 = vld [vmem:[#allocation7 + $0x50] sm:$0xff]
    %v178 = vld [vmem:[#allocation7 + $0x58] sm:$0xff]
    %v179 = vld [vmem:[#allocation7 + $0x60] sm:$0xff]
    %v180 = vld [vmem:[#allocation7 + $0x68] sm:$0xff]
    %v181 = vld [vmem:[#allocation7 + $0x70] sm:$0xff]
    %v182 = vld [vmem:[#allocation7 + $0x78] sm:$0xff]
    %v183 = vld [vmem:[%s4] sm:$0x1]
    %v185 = vlaneseq
    %v186 = vshrl.u32 %v185, 7
    %v187 = vsub.s32 0, %v186
    %v188 = vrot.slane %v183, %v187
    %190 = vmatprep.subr.mxu0 0.0
    %191 = vmatpush1.msra.mxu0 %v182
    %192 = vmatprep.subr.mxu0 0.0
    %193 = vmatpush1.msra.mxu0 %v181
    %194 = vmatprep.subr.mxu0 0.0
    %195 = vmatpush1.msra.mxu0 %v180
    %196 = vmatprep.subr.mxu0 0.0
    %197 = vmatpush1.msra.mxu0 %v179
    %198 = vmatprep.subr.mxu0 0.0
    %199 = vmatpush1.msra.mxu0 %v178
    %200 = vmatprep.subr.mxu0 0.0
    %201 = vmatpush1.msra.mxu0 %v177
    %202 = vmatprep.subr.mxu0 0.0
    %203 = vmatpush1.msra.mxu0 %v176
    %204 = vmatprep.subr.mxu0 0.0
    %205 = vmatpush1.msra.mxu0 %v175
    %206 = vmatprep.subr.mxu0 0.0
    %207 = vmatpush1.msra.mxu0 %v174
    %208 = vmatprep.subr.mxu0 0.0
    %209 = vmatpush1.msra.mxu0 %v173
    %210 = vmatprep.subr.mxu0 0.0
    %211 = vmatpush1.msra.mxu0 %v172
    %212 = vmatprep.subr.mxu0 0.0
    %213 = vmatpush1.msra.mxu0 %v171
    %214 = vmatprep.subr.mxu0 0.0
    %215 = vmatpush1.msra.mxu0 %v170
    %216 = vmatprep.subr.mxu0 0.0
    %217 = vmatpush1.msra.mxu0 %v169
    %218 = vmatprep.subr.mxu0 0.0
    %219 = vmatpush1.msra.mxu0 %v168
    %220 = vmatprep.subr.mxu0 0.0
    %221 = vmatpush1.msra.mxu0 %v167
    %222 = vmatprep.subr.mxu0 0.0
    %223 = vmatpush2.msra.mxu0 0.0
    %224 = vmatprep.subr.mxu0 0.0
    %225 = vmatpush2.msra.mxu0 0.0
    %226 = vmatprep.subr.mxu0 0.0
    %227 = vmatpush2.msra.mxu0 0.0
    %228 = vmatprep.subr.mxu0 0.0
    %229 = vmatpush2.msra.mxu0 0.0
    %230 = vmatprep.subr.mxu0 0.0
    %231 = vmatpush2.msra.mxu0 0.0
    %232 = vmatprep.subr.mxu0 0.0
    %233 = vmatpush2.msra.mxu0 0.0
    %234 = vmatprep.subr.mxu0 0.0
    %235 = vmatpush2.msra.mxu0 0.0
    %236 = vmatprep.subr.mxu0 0.0
    %237 = vmatpush2.msra.mxu0 0.0
    %238 = vmatprep.subr.mxu0 0.0
    %239 = vmatpush2.msra.mxu0 0.0
    %240 = vmatprep.subr.mxu0 0.0
    %241 = vmatpush2.msra.mxu0 0.0
    %242 = vmatprep.subr.mxu0 0.0
    %243 = vmatpush2.msra.mxu0 0.0
    %244 = vmatprep.subr.mxu0 0.0
    %245 = vmatpush2.msra.mxu0 0.0
    %246 = vmatprep.subr.mxu0 0.0
    %247 = vmatpush2.msra.mxu0 0.0
    %248 = vmatprep.subr.mxu0 0.0
    %249 = vmatpush2.msra.mxu0 0.0
    %250 = vmatprep.subr.mxu0 0.0
    %251 = vmatpush2.msra.mxu0 0.0
    %252 = vmatprep.subr.mxu0 0.0
    %253 = vmatpush2.msra.mxu0 0.0
    %254 = vmatprep.mubr.f32.mxu0 0.0
    %255 = vmatmul.mubr.f32.gmra.mxu0 %v166
    %v256 = vpop.f32.mrf.mxu0
    %v257 = vadd.f32 %v188, %v256
    %v258 = vpop.f32.mrf.mxu0
    %259 = vdwg.mxu0
    %v260 = vmax.f32 %v257, 0.0
    %v261 = vld [vmem:[#allocation8] sm:$0xff]
    %v262 = vld [vmem:[#allocation8 + $0x8] sm:$0xff]
    %v263 = vld [vmem:[#allocation8 + $0x10] sm:$0xff]
    %v264 = vld [vmem:[#allocation8 + $0x18] sm:$0xff]
    %v265 = vld [vmem:[#allocation8 + $0x20] sm:$0xff]
    %v266 = vld [vmem:[#allocation8 + $0x28] sm:$0xff]
    %v267 = vld [vmem:[#allocation8 + $0x30] sm:$0xff]
    %v268 = vld [vmem:[#allocation8 + $0x38] sm:$0xff]
    %v269 = vld [vmem:[#allocation8 + $0x40] sm:$0xff]
    %v270 = vld [vmem:[#allocation8 + $0x48] sm:$0xff]
    %v271 = vld [vmem:[#allocation8 + $0x50] sm:$0xff]
    %v272 = vld [vmem:[#allocation8 + $0x58] sm:$0xff]
    %v273 = vld [vmem:[#allocation8 + $0x60] sm:$0xff]
    %v274 = vld [vmem:[#allocation8 + $0x68] sm:$0xff]
    %v275 = vld [vmem:[#allocation8 + $0x70] sm:$0xff]
    %v276 = vld [vmem:[#allocation8 + $0x78] sm:$0xff]
    %v277 = vld [vmem:[%s6] sm:$0x1]
    %v279 = vlaneseq
    %v280 = vshrl.u32 %v279, 7
    %v281 = vsub.s32 0, %v280
    %v282 = vrot.slane %v277, %v281
    %284 = vmatprep.subr.mxu0 0.0
    %285 = vmatpush1.msra.mxu0 %v276
    %286 = vmatprep.subr.mxu0 0.0
    %287 = vmatpush1.msra.mxu0 %v275
    %288 = vmatprep.subr.mxu0 0.0
    %289 = vmatpush1.msra.mxu0 %v274
    %290 = vmatprep.subr.mxu0 0.0
    %291 = vmatpush1.msra.mxu0 %v273
    %292 = vmatprep.subr.mxu0 0.0
    %293 = vmatpush1.msra.mxu0 %v272
    %294 = vmatprep.subr.mxu0 0.0
    %295 = vmatpush1.msra.mxu0 %v271
    %296 = vmatprep.subr.mxu0 0.0
    %297 = vmatpush1.msra.mxu0 %v270
    %298 = vmatprep.subr.mxu0 0.0
    %299 = vmatpush1.msra.mxu0 %v269
    %300 = vmatprep.subr.mxu0 0.0
    %301 = vmatpush1.msra.mxu0 %v268
    %302 = vmatprep.subr.mxu0 0.0
    %303 = vmatpush1.msra.mxu0 %v267
    %304 = vmatprep.subr.mxu0 0.0
    %305 = vmatpush1.msra.mxu0 %v266
    %306 = vmatprep.subr.mxu0 0.0
    %307 = vmatpush1.msra.mxu0 %v265
    %308 = vmatprep.subr.mxu0 0.0
    %309 = vmatpush1.msra.mxu0 %v264
    %310 = vmatprep.subr.mxu0 0.0
    %311 = vmatpush1.msra.mxu0 %v263
    %312 = vmatprep.subr.mxu0 0.0
    %313 = vmatpush1.msra.mxu0 %v262
    %314 = vmatprep.subr.mxu0 0.0
    %315 = vmatpush1.msra.mxu0 %v261
    %316 = vmatprep.subr.mxu0 0.0
    %317 = vmatpush2.msra.mxu0 0.0
    %318 = vmatprep.subr.mxu0 0.0
    %319 = vmatpush2.msra.mxu0 0.0
    %320 = vmatprep.subr.mxu0 0.0
    %321 = vmatpush2.msra.mxu0 0.0
    %322 = vmatprep.subr.mxu0 0.0
    %323 = vmatpush2.msra.mxu0 0.0
    %324 = vmatprep.subr.mxu0 0.0
    %325 = vmatpush2.msra.mxu0 0.0
    %326 = vmatprep.subr.mxu0 0.0
    %327 = vmatpush2.msra.mxu0 0.0
    %328 = vmatprep.subr.mxu0 0.0
    %329 = vmatpush2.msra.mxu0 0.0
    %330 = vmatprep.subr.mxu0 0.0
    %331 = vmatpush2.msra.mxu0 0.0
    %332 = vmatprep.subr.mxu0 0.0
    %333 = vmatpush2.msra.mxu0 0.0
    %334 = vmatprep.subr.mxu0 0.0
    %335 = vmatpush2.msra.mxu0 0.0
    %336 = vmatprep.subr.mxu0 0.0
    %337 = vmatpush2.msra.mxu0 0.0
    %338 = vmatprep.subr.mxu0 0.0
    %339 = vmatpush2.msra.mxu0 0.0
    %340 = vmatprep.subr.mxu0 0.0
    %341 = vmatpush2.msra.mxu0 0.0
    %342 = vmatprep.subr.mxu0 0.0
    %343 = vmatpush2.msra.mxu0 0.0
    %344 = vmatprep.subr.mxu0 0.0
    %345 = vmatpush2.msra.mxu0 0.0
    %346 = vmatprep.subr.mxu0 0.0
    %347 = vmatpush2.msra.mxu0 0.0
    %348 = vmatprep.mubr.f32.mxu0 0.0
    %349 = vmatmul.mubr.f32.gmra.mxu0 %v260
    %v350 = vpop.f32.mrf.mxu0
    %v351 = vadd.f32 %v282, %v350
    %v352 = vpop.f32.mrf.mxu0
    %353 = vdwg.mxu0
    %354 = vst [vmem:[#allocation10] sm:$0xff] %v351
    // Predicated region
    $region46: #{forward.1} parent=1 // pred_check
      _
    $region47: #{forward.1} parent=1 // pred_check_branch
      %356 = sbr.rel (0) target = $region49
    $region48: #{forward.1} parent=1 // pred_region
      %s358 = ssub.s32 128, 128
      %359 = vsyncadd [#allocation4], %s358
      %s361 = sshll.u32 [#allocation10], 4
      %s362 = int_to_ptr.vmem [resolvable:$true] %s361
      %364 = dma.vmem_to_hbm [thread:$0]  %s362, 128, %s7, [#allocation4]
    $region49: #{forward.1} parent=1 // pred_fallthru
      _
    // Predicated region
    $region50: #{forward.1} parent=1 // pred_check
      _
    $region51: #{forward.1} parent=1 // pred_check_branch
      %366 = sbr.rel (0) target = $region53
    $region52: #{forward.1} parent=1 // pred_region
      %367 = dma.done [#allocation4], 128
    $region53: #{forward.1} parent=1 // pred_fallthru
      _
    %368 = vsyncpa [#allocation3], 1
    %369 = vsyncpa [#allocation6], 1
    %370 = vsyncpa [#allocation9], 1
    %371 = vsyncpa [#allocation4], 1

</llo_original>
